<compile_context>
chip_gen: v7x
topology: tpu7x:2x2x1
jax: 0.10.0
libtpu: 0.0.40
codegen_flags: <defaults>
</compile_context>

<pallas_src>
import functools
import itertools

import numpy as np
import jax
import jax.numpy as jnp
from jax.experimental import pallas as pl
from jax.experimental.pallas import tpu as pltpu


# -----------------------------------------------------------------------------
# Static anchor construction (equivalent of the module __init__, pure numpy).
# TODO(synk): the external sptk.get_tetrahedron_vertices / fr.get_relativeV_index
# / fr.label_relative_rotation_simple helpers are unavailable; they are
# reimplemented here (tetrahedral rotation group A4 + vertex permutation table).
# The kanchor=6 (octahedron) branch of the original module is not implemented.
# -----------------------------------------------------------------------------
def build_tetrahedron_anchors():
    vs = np.array([[1.0, 1.0, 1.0],
                   [1.0, -1.0, -1.0],
                   [-1.0, 1.0, -1.0],
                   [-1.0, -1.0, 1.0]], dtype=np.float64)
    vs /= np.linalg.norm(vs, axis=1, keepdims=True)            # (4, 3) unit vertices
    V = vs.T                                                   # (3, 4)
    V_pinv = np.linalg.pinv(V)                                 # (4, 3)

    def _parity(perm):
        p = 0
        for i in range(len(perm)):
            for j in range(i + 1, len(perm)):
                p += perm[i] > perm[j]
        return p % 2

    rots = []
    for perm in itertools.permutations(range(4)):
        if _parity(perm) != 0:          # proper rotations = even permutations (A4, 12 elems)
            continue
        R = V[:, list(perm)] @ V_pinv   # unique linear map with R @ v_i = v_perm[i]
        u, _, vt = np.linalg.svd(R)     # re-orthonormalize for numerical hygiene
        rots.append(u @ vt)
    Rs = np.stack(rots, axis=0)         # (12, 3, 3)

    # get_relativeV_index: trace_idx_ori[a, i] = j such that Rs[a] @ v_i == v_j
    rotated = np.einsum('aij,nj->ani', Rs, vs)                           # (12, 4, 3)
    d = np.linalg.norm(rotated[:, :, None, :] - vs[None, None], axis=-1)
    trace_idx_ori = np.argmin(d, axis=2).astype(np.int32)                # (12, 4)
    return Rs.astype(np.float32), trace_idx_ori


# -----------------------------------------------------------------------------
# Module-level static tables (built once; no per-call wrapper HLOs for them).
# -----------------------------------------------------------------------------
_ANCHORS_NP, _TRACE_IDX_NP = build_tetrahedron_anchors()   # (12,3,3), (12,4)
_NA = _ANCHORS_NP.shape[0]                                 # 12
_NV = _TRACE_IDX_NP.shape[1]                               # 4

# Row 0: anchors flattened row-major (scores trace(anchor^T @ R) = <anchor, R>)
# Row 1: anchors transposed flattened (scores trace(anchor^T @ R^T) = <anchor^T, R>)
_A_BOTH_NP = np.stack([_ANCHORS_NP.reshape(_NA, 9),
                       _ANCHORS_NP.transpose(0, 2, 1).reshape(_NA, 9)],
                      axis=0).astype(np.float32)           # (2, 12, 9)

# Per-label permutation targets: targets_all[a, i, trace_idx[a, i]] = 1
_targets_all = np.zeros((_NA, _NV, _NV), np.float32)
_targets_all[np.arange(_NA)[:, None], np.arange(_NV)[None, :], _TRACE_IDX_NP] = 1.0
# Transposed so the kernel's label select reduces along the lane (last) axis.
_TARGETS_T_NP = np.ascontiguousarray(_targets_all.reshape(_NA, _NV * _NV).T)  # (16, 12)

_A_BOTH = jnp.asarray(_A_BOTH_NP)
_TARGETS_T = jnp.asarray(_TARGETS_T_NP)


# -----------------------------------------------------------------------------
# Pallas kernel: anchor scoring -> label one-hot -> permutation target ->
# pos-weighted BCE-with-logits, one invocation, no grid.
# -----------------------------------------------------------------------------
def _rotation_matching_kernel(dyn_ref, anchors_ref, targets_t_ref, out_ref,
                              *, pos_weight, inv_count, na, nv):
    # dyn_ref is a single lane-dense (8, 128) tile:
    #   row 0, lanes 0..15 : attn0 flat
    #   row 1, lanes 0..15 : attn1 flat
    #   row 2, lanes 0..8  : gt_R0 flat (row-major)
    attn = dyn_ref[0:2, 0:nv * nv]              # (2, nv*nv) logits [attn0; attn1]
    r = dyn_ref[2:3, 0:9]                       # (1, 9)     gt_R0 flat

    anchors_both = anchors_ref[...]             # (2, na, 9)  [anchors; anchors^T]
    targets_t = targets_t_ref[...]              # (nv*nv, na)

    # sims[m, a] = <anchor-table_m[a], R>  (VPU broadcast-MAC, lane reduce)
    sims = jnp.sum(anchors_both * r[:, None, :], axis=-1)                  # (2, na)

    # argmax over anchors (first occurrence on ties) as an exact one-hot mask.
    # float32 iota tie-break is exact for na = 12 (would only break past ~2^24).
    max_sims = jnp.max(sims, axis=-1, keepdims=True)                       # (2, 1)
    iota = jax.lax.broadcasted_iota(jnp.int32, sims.shape, 1).astype(jnp.float32)
    first = jnp.min(jnp.where(sims >= max_sims, iota, jnp.float32(1e9)),
                    axis=-1, keepdims=True)                                # (2, 1)
    onehot = (iota == first).astype(jnp.float32)                           # (2, na)

    # target_m = targets_all[label_m]  (masked sum over anchors, lane reduce)
    targets = jnp.sum(targets_t[None, :, :] * onehot[:, None, :], axis=-1)  # (2, nv*nv)

    # BCEWithLogitsLoss with pos_weight p:
    #   l = (1 - y) * x + (1 + (p - 1) * y) * softplus(-x)
    # softplus(-x) computed stably as log1p(exp(-|x|)) + relu(-x).
    x = attn
    y = targets
    sp_neg = jnp.log1p(jnp.exp(-jnp.abs(x))) + jnp.maximum(-x, 0.0)
    per_elem = (1.0 - y) * x + (1.0 + (pos_weight - 1.0) * y) * sp_neg

    # loss0 + loss1 = mean(matrix0) + mean(matrix1) = sum(per_elem) / (nv*nv)
    out_ref[0, 0] = jnp.sum(per_elem) * inv_count


def rotation_matching_loss(attn_matrix0, attn_matrix1, transform, pos_weight=3.0):
    attn0 = jnp.reshape(jnp.squeeze(attn_matrix0).astype(jnp.float32), (_NV * _NV,))
    attn1 = jnp.reshape(jnp.squeeze(attn_matrix1).astype(jnp.float32), (_NV * _NV,))
    r_flat = jnp.reshape(transform[:3, :3].astype(jnp.float32), (9,))

    # Pack the 41 dynamic floats into one lane-dense f32 tile -> one DMA,
    # unmasked vector load inside the kernel.
    dyn = jnp.zeros((8, 128), jnp.float32)
    dyn = dyn.at[0, 0:_NV * _NV].set(attn0)
    dyn = dyn.at[1, 0:_NV * _NV].set(attn1)
    dyn = dyn.at[2, 0:9].set(r_flat)

    kernel = functools.partial(_rotation_matching_kernel,
                               pos_weight=float(pos_weight),
                               inv_count=1.0 / float(_NV * _NV),
                               na=_NA, nv=_NV)

    out = pl.pallas_call(
        kernel,
        out_shape=jax.ShapeDtypeStruct((1, 1), jnp.float32),
        in_specs=[
            pl.BlockSpec(memory_space=pltpu.MemorySpace.VMEM),   # packed dynamic tile
            pl.BlockSpec(memory_space=pltpu.MemorySpace.VMEM),   # anchor tables (static)
            pl.BlockSpec(memory_space=pltpu.MemorySpace.VMEM),   # target tables (static)
        ],
        out_specs=pl.BlockSpec(memory_space=pltpu.MemorySpace.SMEM),
    )(dyn, _A_BOTH, _TARGETS_T)
    return out[0, 0]


# -----------------------------------------------------------------------------
# Pure-JAX replica of the PyTorch forward for verification.
# -----------------------------------------------------------------------------
def reference_loss(attn_matrix0, attn_matrix1, transform, pos_weight=3.0):
    gt_R0 = transform[:3, :3].astype(jnp.float32)
    anchors = jnp.asarray(_ANCHORS_NP)
    trace_idx_ori = jnp.asarray(_TRACE_IDX_NP)
    nv = trace_idx_ori.shape[1]

    def bce_with_logits(x, y, p):
        sp_neg = jnp.log1p(jnp.exp(-jnp.abs(x))) + jnp.maximum(-x, 0.0)
        return jnp.mean((1.0 - y) * x + (1.0 + (p - 1.0) * y) * sp_neg)

    def one(attn, R):
        sims = jnp.einsum('aij,ij->a', anchors, R)          # trace(anchor^T @ R)
        label = jnp.argmax(sims)
        target = jax.nn.one_hot(trace_idx_ori[label], nv, dtype=jnp.float32)
        return bce_with_logits(jnp.squeeze(attn).astype(jnp.float32), target,
                               float(pos_weight))

    return one(attn_matrix0, gt_R0) + one(attn_matrix1, gt_R0.T)


if __name__ == "__main__":
    key = jax.random.PRNGKey(0)
    k0, k1 = jax.random.split(key)

    # Deterministic ground-truth transform (rotation about z then x + translation).
    a1, a2 = 0.3, 0.7
    c1, s1 = jnp.cos(a1), jnp.sin(a1)
    c2, s2 = jnp.cos(a2), jnp.sin(a2)
    Rz = jnp.array([[c1, -s1, 0.0], [s1, c1, 0.0], [0.0, 0.0, 1.0]], jnp.float32)
    Rx = jnp.array([[1.0, 0.0, 0.0], [0.0, c2, -s2], [0.0, s2, c2]], jnp.float32)
    gt_R = Rz @ Rx
    transform = jnp.eye(4, dtype=jnp.float32)
    transform = transform.at[:3, :3].set(gt_R)
    transform = transform.at[:3, 3].set(jnp.array([0.1, -0.2, 0.3], jnp.float32))

    # Attention logits (the module squeezes these to (4, 4)).
    attn_matrix0 = jax.random.normal(k0, (1, 4, 4), jnp.float32)
    attn_matrix1 = jax.random.normal(k1, (1, 4, 4), jnp.float32)

    loss = rotation_matching_loss(attn_matrix0, attn_matrix1, transform)
    loss = jax.block_until_ready(loss)

    ref = reference_loss(attn_matrix0, attn_matrix1, transform)
    ref = jax.block_until_ready(ref)

    assert jnp.isfinite(loss), loss
    assert jnp.allclose(loss, ref, atol=1e-4, rtol=1e-4), (loss, ref)
    print("KERNEL_OK")
</pallas_src>

<mosaic_0001>
module attributes {stable_mosaic.version = 11 : i64} {
  func.func @_rotation_matching_kernel(%arg0: memref<8x128xf32, #tpu.memory_space<vmem>>, %arg1: memref<2x12x9xf32, #tpu.memory_space<vmem>>, %arg2: memref<16x12xf32, #tpu.memory_space<vmem>>, %arg3: memref<1x1xf32, #tpu.memory_space<smem>>) attributes {dimension_semantics = [], scalar_prefetch = 0 : i64, scratch_operands = 0 : i64, tpu.core_type = #tpu.core_type<tc>} {
    %c0 = arith.constant 0 : index
    %c0_0 = arith.constant 0 : index
    %0 = vector.load %arg0[%c0, %c0_0] : memref<8x128xf32, #tpu.memory_space<vmem>>, vector<2x16xf32>
    %c2 = arith.constant 2 : index
    %c0_1 = arith.constant 0 : index
    %1 = vector.load %arg0[%c2, %c0_1] : memref<8x128xf32, #tpu.memory_space<vmem>>, vector<1x9xf32>
    %c0_2 = arith.constant 0 : index
    %c0_3 = arith.constant 0 : index
    %c0_4 = arith.constant 0 : index
    %2 = vector.load %arg1[%c0_2, %c0_3, %c0_4] : memref<2x12x9xf32, #tpu.memory_space<vmem>>, vector<2x12x9xf32>
    %c0_5 = arith.constant 0 : index
    %c0_6 = arith.constant 0 : index
    %3 = vector.load %arg2[%c0_5, %c0_6] : memref<16x12xf32, #tpu.memory_space<vmem>>, vector<16x12xf32>
    %4 = vector.shape_cast %1 : vector<1x9xf32> to vector<1x1x9xf32>
    %5 = vector.broadcast %4 : vector<1x1x9xf32> to vector<2x12x9xf32>
    %6 = arith.mulf %2, %5 : vector<2x12x9xf32>
    %cst = arith.constant dense<0.000000e+00> : vector<2x12xf32>
    %7 = vector.multi_reduction <add>, %6, %cst [2] : vector<2x12x9xf32> to vector<2x12xf32>
    %cst_7 = arith.constant dense<0xFF800000> : vector<2xf32>
    %8 = vector.multi_reduction <maximumf>, %7, %cst_7 [1] : vector<2x12xf32> to vector<2xf32>
    %9 = vector.shape_cast %8 : vector<2xf32> to vector<2x1xf32>
    %10 = tpu.iota {dimensions = array<i32: 1>} : vector<2x12xi32>
    %11 = arith.sitofp %10 : vector<2x12xi32> to vector<2x12xf32>
    %12 = vector.broadcast %9 : vector<2x1xf32> to vector<2x12xf32>
    %13 = arith.cmpf oge, %7, %12 : vector<2x12xf32>
    %cst_8 = arith.constant 1.000000e+09 : f32
    %14 = vector.broadcast %cst_8 : f32 to vector<2x12xf32>
    %15 = arith.select %13, %11, %14 : vector<2x12xi1>, vector<2x12xf32>
    %cst_9 = arith.constant dense<0x7F800000> : vector<2xf32>
    %16 = vector.multi_reduction <minimumf>, %15, %cst_9 [1] : vector<2x12xf32> to vector<2xf32>
    %17 = vector.shape_cast %16 : vector<2xf32> to vector<2x1xf32>
    %18 = vector.broadcast %17 : vector<2x1xf32> to vector<2x12xf32>
    %19 = arith.cmpf oeq, %11, %18 : vector<2x12xf32>
    %20 = arith.extui %19 : vector<2x12xi1> to vector<2x12xi32>
    %21 = arith.sitofp %20 : vector<2x12xi32> to vector<2x12xf32>
    %22 = vector.shape_cast %3 : vector<16x12xf32> to vector<1x16x12xf32>
    %23 = vector.shape_cast %21 : vector<2x12xf32> to vector<2x1x12xf32>
    %24 = vector.broadcast %22 : vector<1x16x12xf32> to vector<2x16x12xf32>
    %25 = vector.broadcast %23 : vector<2x1x12xf32> to vector<2x16x12xf32>
    %26 = arith.mulf %24, %25 : vector<2x16x12xf32>
    %cst_10 = arith.constant dense<0.000000e+00> : vector<2x16xf32>
    %27 = vector.multi_reduction <add>, %26, %cst_10 [2] : vector<2x16x12xf32> to vector<2x16xf32>
    %28 = math.absf %0 : vector<2x16xf32>
    %cst_11 = arith.constant 0.000000e+00 : f32
    %29 = vector.broadcast %cst_11 : f32 to vector<2x16xf32>
    %30 = arith.subf %29, %28 : vector<2x16xf32>
    %31 = math.exp %30 : vector<2x16xf32>
    %32 = math.log1p %31 : vector<2x16xf32>
    %cst_12 = arith.constant 0.000000e+00 : f32
    %33 = vector.broadcast %cst_12 : f32 to vector<2x16xf32>
    %34 = arith.subf %33, %0 : vector<2x16xf32>
    %cst_13 = arith.constant 0.000000e+00 : f32
    %35 = vector.broadcast %cst_13 : f32 to vector<2x16xf32>
    %36 = arith.maximumf %34, %35 : vector<2x16xf32>
    %37 = arith.addf %32, %36 : vector<2x16xf32>
    %cst_14 = arith.constant 1.000000e+00 : f32
    %38 = vector.broadcast %cst_14 : f32 to vector<2x16xf32>
    %39 = arith.subf %38, %27 : vector<2x16xf32>
    %40 = arith.mulf %39, %0 : vector<2x16xf32>
    %cst_15 = arith.constant 2.000000e+00 : f32
    %41 = vector.broadcast %cst_15 : f32 to vector<2x16xf32>
    %42 = arith.mulf %41, %27 : vector<2x16xf32>
    %cst_16 = arith.constant 1.000000e+00 : f32
    %43 = vector.broadcast %cst_16 : f32 to vector<2x16xf32>
    %44 = arith.addf %43, %42 : vector<2x16xf32>
    %45 = arith.mulf %44, %37 : vector<2x16xf32>
    %46 = arith.addf %40, %45 : vector<2x16xf32>
    %47 = vector.shape_cast %46 : vector<2x16xf32> to vector<1x2x16xf32>
    %cst_17 = arith.constant dense<0.000000e+00> : vector<1xf32>
    %48 = vector.multi_reduction <add>, %47, %cst_17 [1, 2] : vector<1x2x16xf32> to vector<1xf32>
    %49 = vector.shape_cast %48 : vector<1xf32> to vector<1x1x1xf32>
    %50 = vector.extract %49[0, 0, 0] : f32 from vector<1x1x1xf32>
    %cst_18 = arith.constant 6.250000e-02 : f32
    %51 = arith.mulf %50, %cst_18 : f32
    %c0_19 = arith.constant 0 : index
    %c0_20 = arith.constant 0 : index
    %52 = memref.load %arg3[%c0_19, %c0_20] : memref<1x1xf32, #tpu.memory_space<smem>>
    memref.store %51, %arg3[%c0_19, %c0_20] : memref<1x1xf32, #tpu.memory_space<smem>>
    return
  }
}

</mosaic_0001>

<llo_original>
// kernel: tpu_custom_call.1
$region0: #{tpu_custom_call.1}
  #allocation0 [shape = 'u32[]', space=smem, size = 0x4, offset = 0x4, fixed_abs, tag = 'smem constant byte address 0x4 - core index']
  #allocation1 [shape = 'u32[144,128]{1,0:T(1,128)}', space=vmem, size = 0x12000, scoped, tag = 'internal scratch']
  %s0 = inlined_call_operand.vmem [shape: f32[8,128], index: 0, kind: input, shape index: {}]
  %s1 = inlined_call_operand.vmem [shape: f32[2,12,9], index: 1, kind: input, shape index: {}]
  %s2 = inlined_call_operand.vmem [shape: f32[16,12], index: 2, kind: input, shape index: {}]
  %s3 = inlined_call_operand.hbm [shape: f32[1,1], index: 3, kind: output, shape index: {}]
  %s4 = sld [smem:[#allocation0]]
  $region22: #{tpu_custom_call.1} parent=0
    _
  %s6 = ssub.s32 1, %s4
  %s7 = scalar_select 0, %s6, %s4
  $region1: #{tpu_custom_call.1} parent=0
    #allocation2 [shape = 'u8[512]{0}', space=smem, size = 0x200, scoped, tag = 'output window, operand 0, single buffered']
    #allocation3 [shape = 's32[1]{0}', space=sflag, size = 0x4, scoped, tag = 'scoped memory for tpu_custom_call.1']
    %8 = vsyncpa [#allocation3], 0
    // Predicated region
    $region2: #{tpu_custom_call.1} parent=1 // pred_check
      _
    $region3: #{tpu_custom_call.1} parent=1 // pred_check_branch
      %10 = sbr.rel (0) target = $region5
    $region4: #{tpu_custom_call.1} parent=1 // pred_region
      _
    $region5: #{tpu_custom_call.1} parent=1 // pred_fallthru
      _
    // Predicated region
    $region6: #{tpu_custom_call.1} parent=1 // pred_check
      _
    $region7: #{tpu_custom_call.1} parent=1 // pred_check_branch
      %12 = sbr.rel (0) target = $region9
    $region8: #{tpu_custom_call.1} parent=1 // pred_region
      _
    $region9: #{tpu_custom_call.1} parent=1 // pred_fallthru
      _
    // Predicated region
    $region10: #{tpu_custom_call.1} parent=1 // pred_check
      _
    $region11: #{tpu_custom_call.1} parent=1 // pred_check_branch
      %14 = sbr.rel (0) target = $region13
    $region12: #{tpu_custom_call.1} parent=1 // pred_region
      _
    $region13: #{tpu_custom_call.1} parent=1 // pred_fallthru
      _
    %v15 = vld [vmem:[%s0] sm:$0x3]
    %v16 = vld [vmem:[%s0 + $0x2] sm:$0x1]
    %v17 = vld [vmem:[%s1] sm:$0xff]
    %v18 = vld [vmem:[%s1 + $0x8] sm:$0xf]
    %v19 = vld [vmem:[%s1 + $0x10] sm:$0xff]
    %v20 = vld [vmem:[%s1 + $0x18] sm:$0xf]
    %v21 = vld [vmem:[%s2] sm:$0xff]
    %v22 = vld [vmem:[%s2 + $0x8] sm:$0xff]
    %v23 = vlaneseq
    %v24 = vshrl.u32 %v23, 7
    %v25 = vsub.s32 0, %v24
    %v26 = vrot.slane %v16, %v25
    %v27 = vmul.f32 %v17, %v26
    %v28 = vmul.f32 %v18, %v26
    %v29 = vmul.f32 %v19, %v26
    %v30 = vmul.f32 %v20, %v26
    %vm31 = vcmask 72704
    %v32 = vsel %vm31, %v27, 0.0
    %33 = vadd.xlane.f32.xlu0 %v32
    %v34 = vpop.xlane.xlu0 %33
    %vm35 = vcmask 68608
    %v36 = vsel %vm35, %v28, 0.0
    %37 = vadd.xlane.f32.xlu0 %v36
    %v38 = vpop.xlane.xlu0 %37
    %v39 = vsel %vm31, %v29, 0.0
    %40 = vadd.xlane.f32.xlu0 %v39
    %v41 = vpop.xlane.xlu0 %40
    %v42 = vsel %vm35, %v30, 0.0
    %43 = vadd.xlane.f32.xlu0 %v42
    %v44 = vpop.xlane.xlu0 %43
    %v49 = vlaneseq
    %v50 = vand.u32 %v49, 127
    %v51 = vlaneseq
    %v52 = vshrl.u32 %v51, 7
    %v53 = vsub.s32 %v50, %v52
    %v54 = vrot.slane %v34, %v53
    %v55 = vadd.s32 %v50, 4294967288
    %v56 = vlaneseq
    %v57 = vshrl.u32 %v56, 7
    %v58 = vsub.s32 %v55, %v57
    %v59 = vrot.slane %v38, %v58
    %vm60 = vcmask 130112
    %v61 = vsel %vm60, %v59, %v54
    %v62 = vlaneseq
    %v63 = vshrl.u32 %v62, 7
    %v64 = vsub.s32 %v50, %v63
    %v65 = vrot.slane %v41, %v64
    %v66 = vlaneseq
    %v67 = vshrl.u32 %v66, 7
    %v68 = vsub.s32 %v55, %v67
    %v69 = vrot.slane %v44, %v68
    %v70 = vsel %vm60, %v69, %v65
    %vm71 = vcmask 1041409
    %v72 = vsel %vm71, %v70, %v61
    %vm74 = vcmask 91136
    %v75 = vsel %vm74, %v72, -inf
    %76 = vmax.xlane.f32.xlu0 %v75
    %v77 = vpop.xlane.xlu0 %76
    %v78 = vcvt.s32.f32 %v50
    %v80 = vlaneseq
    %v81 = vshrl.u32 %v80, 7
    %v82 = vsub.s32 0, %v81
    %v83 = vrot.slane %v77, %v82
    %v84 = vlaneseq
    %v85 = vshrl.u32 %v84, 7
    %v86 = vsub.s32 1, %v85
    %v87 = vrot.slane %v77, %v86
    %vm90 = vcmp.ge.f32.partialorder %v34, %v83
    %vm91 = vcmp.ge.f32.partialorder %v38, %v83
    %vm92 = vcmp.ge.f32.partialorder %v41, %v87
    %vm93 = vcmp.ge.f32.partialorder %v44, %v87
    %96 = vbcast.lane.b32.xlu0 %v78, 256
    %v97 = vpop.permute.xlu0 %96
    %s99 = sor.u32 256, 8
    %100 = vbcast.lane.b32.xlu0 %v78, %s99
    %v101 = vpop.permute.xlu0 %100
    %v104 = vsel %vm90, %v97, 1e+09
    %v105 = vsel %vm91, %v101, 1e+09
    %v106 = vsel %vm92, %v97, 1e+09
    %v107 = vsel %vm93, %v101, 1e+09
    %112 = vset.pattern.permute.xlu0 0
    %113 = vperm.xlu0 %112, %v104
    %v114 = vpop.permute.xlu0 %113
    %115 = vset.pattern.permute.xlu0 0
    %116 = vperm.xlu0 %115, %v105
    %v117 = vpop.permute.xlu0 %116
    %118 = vset.pattern.permute.xlu0 0
    %119 = vperm.xlu0 %118, %v106
    %v120 = vpop.permute.xlu0 %119
    %121 = vset.pattern.permute.xlu0 0
    %122 = vperm.xlu0 %121, %v107
    %v123 = vpop.permute.xlu0 %122
    %v124 = vlaneseq
    %v125 = vshrl.u32 %v124, 7
    %v126 = vsub.s32 %v50, %v125
    %v127 = vrot.slane %v114, %v126
    %v128 = vlaneseq
    %v129 = vshrl.u32 %v128, 7
    %v130 = vsub.s32 %v55, %v129
    %v131 = vrot.slane %v117, %v130
    %v132 = vsel %vm60, %v131, %v127
    %v133 = vlaneseq
    %v134 = vshrl.u32 %v133, 7
    %v135 = vsub.s32 %v50, %v134
    %v136 = vrot.slane %v120, %v135
    %v137 = vlaneseq
    %v138 = vshrl.u32 %v137, 7
    %v139 = vsub.s32 %v55, %v138
    %v140 = vrot.slane %v123, %v139
    %v141 = vsel %vm60, %v140, %v136
    %v142 = vsel %vm71, %v141, %v132
    %v144 = vsel %vm74, %v142, inf
    %145 = vmin.xlane.f32.xlu0 %v144
    %v146 = vpop.xlane.xlu0 %145
    %vm147 = vcmp.eq.f32.partialorder %v78, %v146
    %v148 = vsel %vm147, 1, 0
    %v149 = vcvt.s32.f32 %v148
    %v152 = vunpack.c.l.s4 1966171168
    %v153 = vunpack.c.0.s8 %v152
    %v154 = vlaneseq
    %v155 = vshrl.u32 %v154, 7
    %v156 = vsub.s32 %v153, %v155
    %v157 = vrot.slane %v149, %v156
    %v158 = vcombine.high %v157, %v157
    %v160 = vunpack.c.l.s4 1966171168
    %v161 = vunpack.c.0.s8 %v160
    %v162 = vlaneseq
    %v163 = vshrl.u32 %v162, 7
    %v164 = vsub.s32 %v161, %v163
    %v165 = vrot.slane %v157, %v164
    %v167 = vunpack.c.l.s4 1966171168
    %v168 = vunpack.c.0.s8 %v167
    %v169 = vlaneseq
    %v170 = vshrl.u32 %v169, 7
    %v171 = vsub.s32 %v168, %v170
    %v172 = vrot.slane %v158, %v171
    %v173 = vlaneseq
    %v174 = vshrl.u32 %v173, 7
    %v175 = vsub.s32 0, %v174
    %v176 = vrot.slane %v165, %v175
    %v177 = vlaneseq
    %v178 = vshrl.u32 %v177, 7
    %v179 = vsub.s32 0, %v178
    %v180 = vrot.slane %v172, %v179
    %v183 = vmul.f32 %v21, %v176
    %v184 = vmul.f32 %v22, %v176
    %v185 = vmul.f32 %v21, %v180
    %v186 = vmul.f32 %v22, %v180
    %vm187 = vcmask 97280
    %v188 = vsel %vm187, %v183, 0.0
    %189 = vadd.xlane.f32.xlu0 %v188
    %v190 = vpop.xlane.xlu0 %189
    %v191 = vsel %vm187, %v184, 0.0
    %192 = vadd.xlane.f32.xlu0 %v191
    %v193 = vpop.xlane.xlu0 %192
    %v194 = vsel %vm187, %v185, 0.0
    %195 = vadd.xlane.f32.xlu0 %v194
    %v196 = vpop.xlane.xlu0 %195
    %v197 = vsel %vm187, %v186, 0.0
    %198 = vadd.xlane.f32.xlu0 %v197
    %v199 = vpop.xlane.xlu0 %198
    %v200 = vand.u32 2147483647, %v15
    %v201 = vsub.f32 0.0, %v200
    %v202 = vmul.f32 %v201, 1.442695
    %v203 = vpow.pop %v202
    %v204 = vadd.f32 %v203, 1.0
    %v205 = vlog2.pop %v204
    %v206 = vmul.f32 %v205, 0.6931472
    %v207 = vmul.f32 -0.5, %v203
    %v208 = vadd.f32 %v207, 1.0
    %v209 = vmul.f32 %v208, %v203
    %v210 = vand.u32 2147483647, %v203
    %vm211 = vcmp.lt.f32.partialorder %v210, 0.0004427343
    %v212 = vsel %vm211, %v209, %v206
    %v213 = vsub.f32 0.0, %v15
    %v214 = vmax.f32 %v213, 0.0
    %v215 = vadd.f32 %v212, %v214
    %v216 = vsub.f32 1.0, %v190
    %v217 = vsub.f32 1.0, %v193
    %v218 = vsub.f32 1.0, %v196
    %v219 = vsub.f32 1.0, %v199
    %v221 = vlaneseq
    %v222 = vshrl.u32 %v221, 7
    %v223 = vsub.s32 0, %v222
    %v224 = vrot.slane %v15, %v223
    %226 = vbcast.lane.b32.xlu0 %v224, 256
    %v227 = vpop.permute.xlu0 %226
    %s229 = sor.u32 256, 8
    %230 = vbcast.lane.b32.xlu0 %v224, %s229
    %v231 = vpop.permute.xlu0 %230
    %v232 = vlaneseq
    %v233 = vshrl.u32 %v232, 7
    %v234 = vsub.s32 1, %v233
    %v235 = vrot.slane %v15, %v234
    %237 = vbcast.lane.b32.xlu0 %v235, 256
    %v238 = vpop.permute.xlu0 %237
    %s240 = sor.u32 256, 8
    %241 = vbcast.lane.b32.xlu0 %v235, %s240
    %v242 = vpop.permute.xlu0 %241
    %v247 = vmul.f32 %v216, %v227
    %v248 = vmul.f32 %v217, %v231
    %v249 = vmul.f32 %v218, %v238
    %v250 = vmul.f32 %v219, %v242
    %v251 = vmul.f32 %v190, 2.0
    %v252 = vmul.f32 %v193, 2.0
    %v253 = vmul.f32 %v196, 2.0
    %v254 = vmul.f32 %v199, 2.0
    %v255 = vadd.f32 %v251, 1.0
    %v256 = vadd.f32 %v252, 1.0
    %v257 = vadd.f32 %v253, 1.0
    %v258 = vadd.f32 %v254, 1.0
    %v260 = vlaneseq
    %v261 = vshrl.u32 %v260, 7
    %v262 = vsub.s32 0, %v261
    %v263 = vrot.slane %v215, %v262
    %265 = vbcast.lane.b32.xlu0 %v263, 256
    %v266 = vpop.permute.xlu0 %265
    %s268 = sor.u32 256, 8
    %269 = vbcast.lane.b32.xlu0 %v263, %s268
    %v270 = vpop.permute.xlu0 %269
    %v271 = vlaneseq
    %v272 = vshrl.u32 %v271, 7
    %v273 = vsub.s32 1, %v272
    %v274 = vrot.slane %v215, %v273
    %276 = vbcast.lane.b32.xlu0 %v274, 256
    %v277 = vpop.permute.xlu0 %276
    %s279 = sor.u32 256, 8
    %280 = vbcast.lane.b32.xlu0 %v274, %s279
    %v281 = vpop.permute.xlu0 %280
    %v286 = vmul.f32 %v255, %v266
    %v287 = vmul.f32 %v256, %v270
    %v288 = vmul.f32 %v257, %v277
    %v289 = vmul.f32 %v258, %v281
    %v290 = vadd.f32 %v247, %v286
    %v291 = vadd.f32 %v248, %v287
    %v292 = vadd.f32 %v249, %v288
    %v293 = vadd.f32 %v250, %v289
    %298 = vset.pattern.permute.xlu0 0
    %299 = vperm.xlu0 %298, %v290
    %v300 = vpop.permute.xlu0 %299
    %301 = vset.pattern.permute.xlu0 0
    %302 = vperm.xlu0 %301, %v291
    %v303 = vpop.permute.xlu0 %302
    %304 = vset.pattern.permute.xlu0 0
    %305 = vperm.xlu0 %304, %v292
    %v306 = vpop.permute.xlu0 %305
    %307 = vset.pattern.permute.xlu0 0
    %308 = vperm.xlu0 %307, %v293
    %v309 = vpop.permute.xlu0 %308
    %v310 = vlaneseq
    %v311 = vshrl.u32 %v310, 7
    %v312 = vsub.s32 %v50, %v311
    %v313 = vrot.slane %v300, %v312
    %v314 = vlaneseq
    %v315 = vshrl.u32 %v314, 7
    %v316 = vsub.s32 %v55, %v315
    %v317 = vrot.slane %v303, %v316
    %v318 = vsel %vm60, %v317, %v313
    %v319 = vlaneseq
    %v320 = vshrl.u32 %v319, 7
    %v321 = vsub.s32 %v50, %v320
    %v322 = vrot.slane %v306, %v321
    %v323 = vlaneseq
    %v324 = vshrl.u32 %v323, 7
    %v325 = vsub.s32 %v55, %v324
    %v326 = vrot.slane %v309, %v325
    %v327 = vsel %vm60, %v326, %v322
    %v328 = vsel %vm71, %v327, %v318
    %vm330 = vcmask 123904
    %v331 = vsel %vm330, %v328, 0.0
    %332 = vadd.xlane.f32.xlu0 %v331
    %v333 = vpop.xlane.xlu0 %332
    %v334 = vrot.slane %v333, 4
    %v335 = vadd.f32 %v333, %v334
    %v336 = vrot.slane %v335, 2
    %v337 = vadd.f32 %v335, %v336
    %v338 = vrot.slane %v337, 1
    %v339 = vadd.f32 %v337, %v338
    %s340 = vtos %v339
    %s341 = smul.f32 %s340, 0.0625
    %s342 = scalar_lea.smem [#allocation2], 0
    %343 = sst [smem:[%s342]] %s341
    // Predicated region
    $region14: #{tpu_custom_call.1} parent=1 // pred_check
      _
    $region15: #{tpu_custom_call.1} parent=1 // pred_check_branch
      %345 = sbr.rel (0) target = $region17
    $region16: #{tpu_custom_call.1} parent=1 // pred_region
      %s347 = ssub.s32 16, 16
      %348 = vsyncadd [#allocation3], %s347
      %351 = dma.smem_to_hbm [#allocation2], 16, %s3, [#allocation3]
    $region17: #{tpu_custom_call.1} parent=1 // pred_fallthru
      _
    // Predicated region
    $region18: #{tpu_custom_call.1} parent=1 // pred_check
      _
    $region19: #{tpu_custom_call.1} parent=1 // pred_check_branch
      %353 = sbr.rel (0) target = $region21
    $region20: #{tpu_custom_call.1} parent=1 // pred_region
      %354 = dma.done [#allocation3], 16
    $region21: #{tpu_custom_call.1} parent=1 // pred_fallthru
      _
    %355 = sfence
    %356 = vsyncpa [#allocation3], 1

</llo_original>
